<compile_context>
chip_gen: v7x
topology: tpu7x:2x2x1
jax: 0.10.0
libtpu: 0.0.40
codegen_flags: <defaults>
</compile_context>

<pallas_src>
import math

import jax
import jax.numpy as jnp
from jax.experimental import pallas as pl
from jax.experimental.pallas import tpu as pltpu


def _sage_kernel(a_ref, xs_ref, xd_ref, w_ref, b_ref, o_ref, acc_ref):
    """One (row-tile, k-tile) grid step.

    a_ref  : [tm, tk]          bf16 row-normalized adjacency tile (dst x src)
    xs_ref : [tk, F_in]        bf16 source-node features (aggregation operand)
    xd_ref : [tm, F_in]        f32  destination-node features (self projection)
    w_ref  : [2*F_in, F_out_p] f32  stacked [W_self^T ; W_neigh^T] (lane-padded)
    b_ref  : [1, F_out_p]      f32  fused bias b_self + b_neigh (lane-padded)
    o_ref  : [tm, F_out_p]     f32  output tile (lane-dense)
    acc_ref: [tm, F_in]        f32  h_neigh accumulator (VMEM scratch)
    """
    k = pl.program_id(1)

    @pl.when(k == 0)
    def _init():
        acc_ref[...] = jnp.zeros_like(acc_ref)

    # Neighbor mean aggregation on the MXU (bf16 inputs, f32 accumulation).
    acc_ref[...] += jnp.dot(
        a_ref[...], xs_ref[...], preferred_element_type=jnp.float32
    )

    @pl.when(k == pl.num_programs(1) - 1)
    def _epilogue():
        # Fused projection: one MXU push instead of two tiny ones.
        z = jnp.concatenate([xd_ref[...], acc_ref[...]], axis=-1)  # [tm, 2*F_in]
        out = jnp.dot(z, w_ref[...], preferred_element_type=jnp.float32) + b_ref[...]
        o_ref[...] = out.astype(o_ref.dtype)


def _pad_to(x, rows, cols):
    r, c = x.shape
    return jnp.pad(x, ((0, rows - r), (0, cols - c)))


def sage_gconv_mean(adj_norm, x, w_self, w_neigh, b_self, b_neigh, *, tm=256, tk=512):
    """SAGEConv 'mean' forward.

    adj_norm : [N, N]       row-normalized adjacency (dst x src), f32
    x        : [N, F_in]    node features, f32
    w_self   : [F_out, F_in] torch-Linear-layout fc_self weight
    w_neigh  : [F_out, F_in] torch-Linear-layout fc_neigh weight
    b_self, b_neigh : [F_out] biases
    """
    N, F_in = x.shape
    F_out = w_self.shape[0]

    assert tm % 8 == 0, "tm must be a multiple of 8 (sublane)"
    assert tk % 128 == 0, "tk must be a multiple of 128 (lane dim of the A tile)"

    # Padded problem sizes: row tile multiple for dst, k tile multiple for src,
    # and a lane-dense (multiple of 128) output width.
    n_r = pl.cdiv(N, tm) * tm
    n_c = pl.cdiv(N, tk) * tk
    f_out_p = pl.cdiv(F_out, 128) * 128

    # bf16 for the bandwidth-dominant operands (A is O(N^2) bytes); f32 accumulation
    # happens inside the kernel.  Zero padding keeps the math exact.
    a_p = _pad_to(adj_norm.astype(jnp.float32), n_r, n_c).astype(jnp.bfloat16)
    xs_p = _pad_to(x.astype(jnp.float32), n_c, F_in).astype(jnp.bfloat16)
    xd_p = _pad_to(x.astype(jnp.float32), n_r, F_in)

    # Host-side fusion: stack the two projection weights and combine the two biases.
    w_stack = jnp.concatenate(
        [w_self.T.astype(jnp.float32), w_neigh.T.astype(jnp.float32)], axis=0
    )  # [2*F_in, F_out]
    w_p = _pad_to(w_stack, 2 * F_in, f_out_p)
    b_p = _pad_to(
        (b_self + b_neigh).astype(jnp.float32).reshape(1, F_out), 1, f_out_p
    )

    grid = (n_r // tm, n_c // tk)

    # Explicit VMEM budget: 2x double-buffered inputs/outputs + scratch, with headroom.
    per_step = (
        tm * tk * 2            # A tile (bf16)
        + tk * F_in * 2        # x_src tile (bf16)
        + tm * F_in * 4        # x_dst tile (f32)
        + 2 * F_in * f_out_p * 4  # stacked weights
        + f_out_p * 4          # bias
        + tm * f_out_p * 4     # output tile
    )
    vmem_limit = min(48 * 1024 * 1024, max(4 * 1024 * 1024, 4 * per_step))

    cost = pl.CostEstimate(
        flops=2 * n_r * n_c * F_in + 2 * n_r * (2 * F_in) * f_out_p,
        transcendentals=0,
        bytes_accessed=(
            n_r * n_c * 2          # A
            + n_c * F_in * 2       # x_src
            + n_r * F_in * 4       # x_dst
            + 2 * F_in * f_out_p * 4
            + f_out_p * 4
            + n_r * f_out_p * 4    # output
        ),
    )

    out_p = pl.pallas_call(
        _sage_kernel,
        out_shape=jax.ShapeDtypeStruct((n_r, f_out_p), jnp.float32),
        grid_spec=pltpu.PrefetchScalarGridSpec(
            num_scalar_prefetch=0,
            grid=grid,
            in_specs=[
                pl.BlockSpec((tm, tk), lambda i, k: (i, k)),            # A tile
                pl.BlockSpec((tk, F_in), lambda i, k: (k, 0)),          # X (src rows)
                pl.BlockSpec((tm, F_in), lambda i, k: (i, 0)),          # X (dst rows)
                pl.BlockSpec((2 * F_in, f_out_p), lambda i, k: (0, 0)),  # stacked W
                pl.BlockSpec((1, f_out_p), lambda i, k: (0, 0)),        # fused bias
            ],
            out_specs=pl.BlockSpec((tm, f_out_p), lambda i, k: (i, 0)),  # fixed along k
            scratch_shapes=[pltpu.VMEM((tm, F_in), jnp.float32)],
        ),
        compiler_params=pltpu.CompilerParams(
            dimension_semantics=("parallel", "arbitrary"),
            vmem_limit_bytes=int(vmem_limit),
        ),
        cost_estimate=cost,
    )(a_p, xs_p, xd_p, w_p, b_p)

    return out_p[:N, :F_out]


def xavier_uniform(key, fan_out, fan_in, gain):
    # torch.nn.init.xavier_uniform_ on a (out, in) weight
    bound = gain * math.sqrt(6.0 / (fan_in + fan_out))
    return jax.random.uniform(
        key, (fan_out, fan_in), dtype=jnp.float32, minval=-bound, maxval=bound
    )


if __name__ == "__main__":
    N = 200          # number of nodes (not tile-aligned: exercises padding)
    in_feats = 8
    out_feats = 32

    key = jax.random.PRNGKey(0)
    k_x, k_adj, k_ws, k_wn, k_bs, k_bn = jax.random.split(key, 6)

    # node features
    x = jax.random.normal(k_x, (N, in_feats), dtype=jnp.float32)

    # deterministic random graph -> dense adjacency A[dst, src] = 1 if edge src->dst
    adj = (jax.random.uniform(k_adj, (N, N)) < 0.05).astype(jnp.float32)
    deg = jnp.sum(adj, axis=1, keepdims=True)  # in-degree per dst node
    adj_norm = jnp.where(deg > 0, adj / jnp.maximum(deg, 1.0), 0.0)  # mean agg; 0 for isolated

    # parameters mirroring reset_parameters (xavier_uniform, relu gain)
    gain = math.sqrt(2.0)
    w_self = xavier_uniform(k_ws, out_feats, in_feats, gain)
    w_neigh = xavier_uniform(k_wn, out_feats, in_feats, gain)
    b_bound = 1.0 / math.sqrt(in_feats)
    b_self = jax.random.uniform(k_bs, (out_feats,), minval=-b_bound, maxval=b_bound)
    b_neigh = jax.random.uniform(k_bn, (out_feats,), minval=-b_bound, maxval=b_bound)

    # small tiles for the toy graph -> grid (2, 2): exercises padding + k accumulation
    out = sage_gconv_mean(adj_norm, x, w_self, w_neigh, b_self, b_neigh, tm=128, tk=128)
    out = jax.block_until_ready(out)

    # pure-JAX reference (same bf16 quantization of A / X_src as the kernel's agg path)
    a_q = adj_norm.astype(jnp.bfloat16).astype(jnp.float32)
    x_q = x.astype(jnp.bfloat16).astype(jnp.float32)
    h_neigh_ref = jnp.dot(a_q, x_q, precision=jax.lax.Precision.HIGHEST)
    ref = (
        jnp.dot(x, w_self.T, precision=jax.lax.Precision.HIGHEST)
        + jnp.dot(h_neigh_ref, w_neigh.T, precision=jax.lax.Precision.HIGHEST)
        + b_self
        + b_neigh
    )

    assert out.shape == (N, out_feats)
    max_err = float(jnp.max(jnp.abs(out - ref)))
    assert jnp.allclose(out, ref, atol=2e-2, rtol=2e-2), f"max abs err = {max_err}"

    print("KERNEL_OK")
</pallas_src>

<mosaic_0001>
module attributes {stable_mosaic.version = 11 : i64} {
  func.func @_sage_kernel(%arg0: i32, %arg1: i32, %arg2: memref<128x128xbf16, #tpu.memory_space<vmem>>, %arg3: memref<128x8xbf16, #tpu.memory_space<vmem>>, %arg4: memref<128x8xf32, #tpu.memory_space<vmem>>, %arg5: memref<16x128xf32, #tpu.memory_space<vmem>>, %arg6: memref<1x128xf32, #tpu.memory_space<vmem>>, %arg7: memref<128x128xf32, #tpu.memory_space<vmem>>, %arg8: memref<128x8xf32, #tpu.memory_space<vmem>>) attributes {dimension_semantics = [#tpu.dimension_semantics<parallel>, #tpu.dimension_semantics<arbitrary>], iteration_bounds = array<i64: 2, 2>, scalar_prefetch = 0 : i64, scratch_operands = 1 : i64, tpu.core_type = #tpu.core_type<tc>, window_params = [{transform_indices = @transform_0, window_bounds = array<i64: 128, 128>}, {transform_indices = @transform_1, window_bounds = array<i64: 128, 8>}, {transform_indices = @transform_2, window_bounds = array<i64: 128, 8>}, {pipeline_mode = #tpu.pipeline_mode<synchronous>, transform_indices = @transform_3, window_bounds = array<i64: 16, 128>}, {pipeline_mode = #tpu.pipeline_mode<synchronous>, transform_indices = @transform_4, window_bounds = array<i64: 1, 128>}, {transform_indices = @transform_5, window_bounds = array<i64: 128, 128>}]} {
    %c0_i32 = arith.constant 0 : i32
    %0 = arith.cmpi eq, %arg1, %c0_i32 : i32
    %1 = arith.extui %0 : i1 to i32
    %c0_i32_0 = arith.constant 0 : i32
    %2 = arith.cmpi ne, %1, %c0_i32_0 : i32
    scf.if %2 {
      %cst_9 = arith.constant 0.000000e+00 : f32
      %12 = vector.broadcast %cst_9 : f32 to vector<128x8xf32>
      %c0_10 = arith.constant 0 : index
      %c0_11 = arith.constant 0 : index
      %13 = vector.load %arg8[%c0_10, %c0_11] : memref<128x8xf32, #tpu.memory_space<vmem>>, vector<128x8xf32>
      tpu.vector_store %arg8[%c0_10, %c0_11], %12 {strides = array<i32>} : memref<128x8xf32, #tpu.memory_space<vmem>>, vector<128x8xf32>,
    } else {
    }
    %c0 = arith.constant 0 : index
    %c0_1 = arith.constant 0 : index
    %3 = vector.load %arg8[%c0, %c0_1] : memref<128x8xf32, #tpu.memory_space<vmem>>, vector<128x8xf32>
    %c0_2 = arith.constant 0 : index
    %c0_3 = arith.constant 0 : index
    %4 = vector.load %arg2[%c0_2, %c0_3] : memref<128x128xbf16, #tpu.memory_space<vmem>>, vector<128x128xbf16>
    %c0_4 = arith.constant 0 : index
    %c0_5 = arith.constant 0 : index
    %5 = vector.load %arg3[%c0_4, %c0_5] : memref<128x8xbf16, #tpu.memory_space<vmem>>, vector<128x8xbf16>
    %cst = arith.constant dense<0.000000e+00> : vector<128x8xf32>
    %6 = tpu.matmul %4, %5, %cst {dimension_numbers = #tpu.dot_dimension_numbers<[1], [0], [0], [1], [0, 0, 1, 1], [], []>} : vector<128x128xbf16>, vector<128x8xbf16>, vector<128x8xf32> -> vector<128x8xf32>
    %7 = arith.addf %3, %6 : vector<128x8xf32>
    %c0_6 = arith.constant 0 : index
    %c0_7 = arith.constant 0 : index
    %8 = vector.load %arg8[%c0_6, %c0_7] : memref<128x8xf32, #tpu.memory_space<vmem>>, vector<128x8xf32>
    tpu.vector_store %arg8[%c0_6, %c0_7], %7 {strides = array<i32>} : memref<128x8xf32, #tpu.memory_space<vmem>>, vector<128x8xf32>,
    %c1_i32 = arith.constant 1 : i32
    %9 = arith.cmpi eq, %arg1, %c1_i32 : i32
    %10 = arith.extui %9 : i1 to i32
    %c0_i32_8 = arith.constant 0 : i32
    %11 = arith.cmpi ne, %10, %c0_i32_8 : i32
    scf.if %11 {
      %c0_9 = arith.constant 0 : index
      %c0_10 = arith.constant 0 : index
      %12 = vector.load %arg4[%c0_9, %c0_10] : memref<128x8xf32, #tpu.memory_space<vmem>>, vector<128x8xf32>
      %c0_11 = arith.constant 0 : index
      %c0_12 = arith.constant 0 : index
      %13 = vector.load %arg8[%c0_11, %c0_12] : memref<128x8xf32, #tpu.memory_space<vmem>>, vector<128x8xf32>
      %14 = tpu.concatenate %12, %13 in 1 : vector<128x8xf32>, vector<128x8xf32> -> vector<128x16xf32>
      %c0_13 = arith.constant 0 : index
      %c0_14 = arith.constant 0 : index
      %15 = vector.load %arg5[%c0_13, %c0_14] : memref<16x128xf32, #tpu.memory_space<vmem>>, vector<16x128xf32>
      %cst_15 = arith.constant dense<0.000000e+00> : vector<128x128xf32>
      %16 = tpu.matmul %14, %15, %cst_15 {dimension_numbers = #tpu.dot_dimension_numbers<[1], [0], [0], [1], [0, 0, 1, 1], [], []>} : vector<128x16xf32>, vector<16x128xf32>, vector<128x128xf32> -> vector<128x128xf32>
      %c0_16 = arith.constant 0 : index
      %c0_17 = arith.constant 0 : index
      %17 = vector.load %arg6[%c0_16, %c0_17] : memref<1x128xf32, #tpu.memory_space<vmem>>, vector<1x128xf32>
      %18 = vector.broadcast %17 : vector<1x128xf32> to vector<128x128xf32>
      %19 = arith.addf %16, %18 : vector<128x128xf32>
      %c0_18 = arith.constant 0 : index
      %c0_19 = arith.constant 0 : index
      %20 = vector.load %arg7[%c0_18, %c0_19] : memref<128x128xf32, #tpu.memory_space<vmem>>, vector<128x128xf32>
      tpu.vector_store %arg7[%c0_18, %c0_19], %19 {strides = array<i32>} : memref<128x128xf32, #tpu.memory_space<vmem>>, vector<128x128xf32>,
    } else {
    }
    return
  }
  func.func @transform_0(%arg0: i32, %arg1: i32) -> (i32, i32) {
    %c0_i32 = arith.constant 0 : i32
    return %arg0, %arg1 : i32, i32
  }
  func.func @transform_1(%arg0: i32, %arg1: i32) -> (i32, i32) {
    %c0_i32 = arith.constant 0 : i32
    %c0_i32_0 = arith.constant 0 : i32
    return %arg1, %c0_i32 : i32, i32
  }
  func.func @transform_2(%arg0: i32, %arg1: i32) -> (i32, i32) {
    %c0_i32 = arith.constant 0 : i32
    %c0_i32_0 = arith.constant 0 : i32
    return %arg0, %c0_i32 : i32, i32
  }
  func.func @transform_3(%arg0: i32, %arg1: i32) -> (i32, i32) {
    %c0_i32 = arith.constant 0 : i32
    %c0_i32_0 = arith.constant 0 : i32
    %c0_i32_1 = arith.constant 0 : i32
    return %c0_i32, %c0_i32_0 : i32, i32
  }
  func.func @transform_4(%arg0: i32, %arg1: i32) -> (i32, i32) {
    %c0_i32 = arith.constant 0 : i32
    %c0_i32_0 = arith.constant 0 : i32
    %c0_i32_1 = arith.constant 0 : i32
    return %c0_i32, %c0_i32_0 : i32, i32
  }
  func.func @transform_5(%arg0: i32, %arg1: i32) -> (i32, i32) {
    %c0_i32 = arith.constant 0 : i32
    %c0_i32_0 = arith.constant 0 : i32
    return %arg0, %c0_i32 : i32, i32
  }
}

</mosaic_0001>

<llo_original>
// kernel: tpu_custom_call.1
$region0: #{tpu_custom_call.1}
  #allocation0 [shape = 'u32[]', space=smem, size = 0x4, offset = 0x4, fixed_abs, tag = 'smem constant byte address 0x4 - core index']
  #allocation1 [shape = 'u32[144,128]{1,0:T(1,128)}', space=vmem, size = 0x12000, scoped, tag = 'internal scratch']
  #allocation2 [shape = 'f32[128,8]{1,0:T(8,128)}', space=vmem, size = 0x10000, scoped, tag = 'scratch operand']
  %s0 = inlined_call_operand.vmem [shape: bf16[256,256], index: 0, kind: input, shape index: {}]
  %s1 = inlined_call_operand.vmem [shape: bf16[256,8], index: 1, kind: input, shape index: {}]
  %s2 = inlined_call_operand.vmem [shape: f32[256,8], index: 2, kind: input, shape index: {}]
  %s3 = inlined_call_operand.vmem [shape: f32[16,128], index: 3, kind: input, shape index: {}]
  %s4 = inlined_call_operand.vmem [shape: f32[1,128], index: 4, kind: input, shape index: {}]
  %s5 = inlined_call_operand.hbm [shape: f32[256,128], index: 5, kind: output, shape index: {}]
  %s6 = sld [smem:[#allocation0]]
  $region102: #{tpu_custom_call.1} parent=0
    _
  %s8 = ssub.s32 1, %s6
  %s9 = scalar_select 0, %s8, %s6
  $region1: #{tpu_custom_call.1} parent=0
    #allocation3 [shape = 'u8[65536]{0}', space=vmem, size = 0x10000, scoped, tag = 'input window, operand 0']
    #allocation4 [shape = 'u8[131072]{0}', space=vmem, size = 0x20000, scoped, tag = 'output window, operand 0']
    #allocation5 [shape = 's32[2]{0}', space=sflag, size = 0x8, scoped, tag = 'scoped memory for tpu_custom_call.1']
    %10 = vsyncpa [#allocation5], 0
    %s11 = scalar_lea.sflag [#allocation5], 1
    %12 = vsyncpa %s11, 0
    loop: start=0, step=1, limit=6
    $region2: #{tpu_custom_call.1} parent=1 // loop_pre_header
      _
    $region3: #{tpu_custom_call.1} parent=1 // loop_header
      %s14 = sphi 0, %s18
      %p15 = scmp.ge.s32.totalorder %s14, 6
      %s21 = sphi 0, %s33
      %s22 = sphi 0, %s29
      %s23 = sphi 0, %s21
      %s24 = sphi 0, %s22
      %s25 = sphi 0, %s23
      %s26 = sphi 0, %s24
      %s38 = sphi 0, %s40
      %s41 = sphi 0, %s38
      %s42 = sphi 0, %s41
      %s58 = sphi 0, %s42
      %s64 = sphi 0, %s66
      %s67 = sphi 0, %s64
      %s68 = sphi 0, %s67
      %s84 = sphi 0, %s68
      %s90 = sphi 0, %s92
      %s93 = sphi 0, %s90
      %s94 = sphi 0, %s93
      %s110 = sphi 0, %s94
      %s114 = sphi 0, %s114
      %s116 = sphi 0, %s114
      %s117 = sphi 0, %s116
      %s131 = sphi 0, %s117
      %s135 = sphi 0, %s135
      %s137 = sphi 0, %s135
      %s138 = sphi 0, %s137
      %s152 = sphi 0, %s138
      %s158 = sphi 0, %s160
      %s161 = sphi 0, %s158
      %s162 = sphi 0, %s161
      %s178 = sphi 0, %s162
    $region4: #{tpu_custom_call.1} parent=1 // loop_header_branch
      %17 = sbr.rel (%p15) target = $region8
    $region5: #{tpu_custom_call.1} parent=1 // loop_body
      %s19 = ssub.s32 %s14, 1
      %s20 = ssub.s32 %s14, 2
      %s27 = sadd.s32 1, %s22
      %p28 = scmp.ge.s32.totalorder %s27, 2
      %s29 = scalar_select %p28, 0, %s27
      %s30 = sadd.s32 1, %s21
      %s31 = scalar_select %p28, %s30, %s21
      %p32 = scmp.ge.s32.totalorder %s31, 2
      %s33 = scalar_select %p32, 0, %s31
      %s34 = ssub.s32 %s21, %s33
      %s35 = ssub.s32 %s22, %s29
      %s36 = sor.u32 %s34, %s35
      %p37 = scmp.eq.s32.totalorder %s36, 0
      %s39 = sadd.s32 %s38, 1
      %s40 = scalar_select %p37, %s38, %s39
      %p43 = pneg %p37
      %p44 = scmp.eq.s32.totalorder %s14, 3
      %p45 = por %p43, %p44
      %p46 = scmp.ne.s32.totalorder %s38, %s41
      %p47 = scmp.eq.s32.totalorder %s14, 0
      %p48 = por %p46, %p47
      %p49 = scmp.ne.s32.totalorder %s38, %s41
      %p50 = scmp.eq.s32.totalorder %s19, 3
      %p51 = por %p49, %p50
      %p52 = scmp.ne.s32.totalorder %s41, %s42
      %p53 = scmp.eq.s32.totalorder %s19, 0
      %p54 = por %p52, %p53
      %p55 = scmp.ne.s32.totalorder %s41, %s42
      %p56 = scmp.eq.s32.totalorder %s20, 3
      %p57 = por %p55, %p56
      %p59 = scmp.ne.s32.totalorder %s42, %s58
      %p60 = scmp.eq.s32.totalorder %s20, 0
      %p61 = por %p59, %p60
      %s62 = ssub.s32 %s22, %s29
      %p63 = scmp.eq.s32.totalorder %s62, 0
      %s65 = sadd.s32 %s64, 1
      %s66 = scalar_select %p63, %s64, %s65
      %p69 = pneg %p63
      %p70 = scmp.eq.s32.totalorder %s14, 3
      %p71 = por %p69, %p70
      %p72 = scmp.ne.s32.totalorder %s64, %s67
      %p73 = scmp.eq.s32.totalorder %s14, 0
      %p74 = por %p72, %p73
      %p75 = scmp.ne.s32.totalorder %s64, %s67
      %p76 = scmp.eq.s32.totalorder %s19, 3
      %p77 = por %p75, %p76
      %p78 = scmp.ne.s32.totalorder %s67, %s68
      %p79 = scmp.eq.s32.totalorder %s19, 0
      %p80 = por %p78, %p79
      %p81 = scmp.ne.s32.totalorder %s67, %s68
      %p82 = scmp.eq.s32.totalorder %s20, 3
      %p83 = por %p81, %p82
      %p85 = scmp.ne.s32.totalorder %s68, %s84
      %p86 = scmp.eq.s32.totalorder %s20, 0
      %p87 = por %p85, %p86
      %s88 = ssub.s32 %s21, %s33
      %p89 = scmp.eq.s32.totalorder %s88, 0
      %s91 = sadd.s32 %s90, 1
      %s92 = scalar_select %p89, %s90, %s91
      %p95 = pneg %p89
      %p96 = scmp.eq.s32.totalorder %s14, 3
      %p97 = por %p95, %p96
      %p98 = scmp.ne.s32.totalorder %s90, %s93
      %p99 = scmp.eq.s32.totalorder %s14, 0
      %p100 = por %p98, %p99
      %p101 = scmp.ne.s32.totalorder %s90, %s93
      %p102 = scmp.eq.s32.totalorder %s19, 3
      %p103 = por %p101, %p102
      %p104 = scmp.ne.s32.totalorder %s93, %s94
      %p105 = scmp.eq.s32.totalorder %s19, 0
      %p106 = por %p104, %p105
      %p107 = scmp.ne.s32.totalorder %s93, %s94
      %p108 = scmp.eq.s32.totalorder %s20, 3
      %p109 = por %p107, %p108
      %p111 = scmp.ne.s32.totalorder %s94, %s110
      %p112 = scmp.eq.s32.totalorder %s20, 0
      %p113 = por %p111, %p112
      %s115 = sadd.s32 %s114, 1
      %p118 = scmp.eq.s32.totalorder %s14, 3
      %p119 = scmp.ne.s32.totalorder %s114, %s116
      %p120 = scmp.eq.s32.totalorder %s14, 0
      %p121 = por %p119, %p120
      %p122 = scmp.ne.s32.totalorder %s114, %s116
      %p123 = scmp.eq.s32.totalorder %s19, 3
      %p124 = por %p122, %p123
      %p125 = scmp.ne.s32.totalorder %s116, %s117
      %p126 = scmp.eq.s32.totalorder %s19, 0
      %p127 = por %p125, %p126
      %p128 = scmp.ne.s32.totalorder %s116, %s117
      %p129 = scmp.eq.s32.totalorder %s20, 3
      %p130 = por %p128, %p129
      %p132 = scmp.ne.s32.totalorder %s117, %s131
      %p133 = scmp.eq.s32.totalorder %s20, 0
      %p134 = por %p132, %p133
      %s136 = sadd.s32 %s135, 1
      %p139 = scmp.eq.s32.totalorder %s14, 3
      %p140 = scmp.ne.s32.totalorder %s135, %s137
      %p141 = scmp.eq.s32.totalorder %s14, 0
      %p142 = por %p140, %p141
      %p143 = scmp.ne.s32.totalorder %s135, %s137
      %p144 = scmp.eq.s32.totalorder %s19, 3
      %p145 = por %p143, %p144
      %p146 = scmp.ne.s32.totalorder %s137, %s138
      %p147 = scmp.eq.s32.totalorder %s19, 0
      %p148 = por %p146, %p147
      %p149 = scmp.ne.s32.totalorder %s137, %s138
      %p150 = scmp.eq.s32.totalorder %s20, 3
      %p151 = por %p149, %p150
      %p153 = scmp.ne.s32.totalorder %s138, %s152
      %p154 = scmp.eq.s32.totalorder %s20, 0
      %p155 = por %p153, %p154
      %s156 = ssub.s32 %s21, %s33
      %p157 = scmp.eq.s32.totalorder %s156, 0
      %s159 = sadd.s32 %s158, 1
      %s160 = scalar_select %p157, %s158, %s159
      %p163 = pneg %p157
      %p164 = scmp.eq.s32.totalorder %s14, 3
      %p165 = por %p163, %p164
      %p166 = scmp.ne.s32.totalorder %s158, %s161
      %p167 = scmp.eq.s32.totalorder %s14, 0
      %p168 = por %p166, %p167
      %p169 = scmp.ne.s32.totalorder %s158, %s161
      %p170 = scmp.eq.s32.totalorder %s19, 3
      %p171 = por %p169, %p170
      %p172 = scmp.ne.s32.totalorder %s161, %s162
      %p173 = scmp.eq.s32.totalorder %s19, 0
      %p174 = por %p172, %p173
      %p175 = scmp.ne.s32.totalorder %s161, %s162
      %p176 = scmp.eq.s32.totalorder %s20, 3
      %p177 = por %p175, %p176
      %p179 = scmp.ne.s32.totalorder %s162, %s178
      %p180 = scmp.eq.s32.totalorder %s20, 0
      %p181 = por %p179, %p180
      %p182 = scmp.le.s32.totalorder 1, %s14
      %p183 = scmp.lt.s32.totalorder %s14, 5
      %p184 = pnand %p182, %p183
      %p185 = pneg %p184
      // Predicated region
      $region9: #{tpu_custom_call.1} parent=5 // pred_check
        _
      $region10: #{tpu_custom_call.1} parent=5 // pred_check_branch
        %187 = sbr.rel (%p184) target = $region12
      $region11: #{tpu_custom_call.1} parent=5 // pred_region
        %s188 = ssub.s32 %s14, 1
        // Predicated region
        $region13: #{tpu_custom_call.1} parent=11 // pred_check
          %p189 = pneg %p127
        $region14: #{tpu_custom_call.1} parent=11 // pred_check_branch
          %191 = sbr.rel (%p189) target = $region16
        $region15: #{tpu_custom_call.1} parent=11 // pred_region
          _
        $region16: #{tpu_custom_call.1} parent=11 // pred_fallthru
          _
        // Predicated region
        $region17: #{tpu_custom_call.1} parent=11 // pred_check
          %p192 = pneg %p148
        $region18: #{tpu_custom_call.1} parent=11 // pred_check_branch
          %194 = sbr.rel (%p192) target = $region20
        $region19: #{tpu_custom_call.1} parent=11 // pred_region
          _
        $region20: #{tpu_custom_call.1} parent=11 // pred_fallthru
          _
      $region12: #{tpu_custom_call.1} parent=5 // pred_fallthru
        _
      %p195 = scmp.lt.s32.totalorder %s14, 4
      // Predicated region
      $region21: #{tpu_custom_call.1} parent=5 // pred_check
        %p196 = pneg %p195
      $region22: #{tpu_custom_call.1} parent=5 // pred_check_branch
        %198 = sbr.rel (%p196) target = $region24
      $region23: #{tpu_custom_call.1} parent=5 // pred_region
        // Predicated region
        $region25: #{tpu_custom_call.1} parent=23 // pred_check
          %p199 = pneg %p48
        $region26: #{tpu_custom_call.1} parent=23 // pred_check_branch
          %201 = sbr.rel (%p199) target = $region28
        $region27: #{tpu_custom_call.1} parent=23 // pred_region
          %s202 = sand.u32 %s38, 1
          %s203 = sand.u32 %s38, 1
          %s204 = smul.addr %s203, 64
          %s205 = scalar_lea.vmem [#allocation3], %s204
          %s206 = smul.u32 16, %s21
          %s207 = smul.addr %s206, 2
          %s208 = sadd.s32 %s22, %s207
          %s209 = smul.addr %s208, 4
          %s210 = scalar_lea.vmem %s0, %s209
          // Predicated region
          $region29: #{tpu_custom_call.1} parent=27 // pred_check
            _
          $region30: #{tpu_custom_call.1} parent=27 // pred_check_branch
            %212 = sbr.rel (0) target = $region32
          $region31: #{tpu_custom_call.1} parent=27 // pred_region
            // Predicated region
            $region33: #{tpu_custom_call.1} parent=31 // pred_check
              _
            $region34: #{tpu_custom_call.1} parent=31 // pred_check_branch
              %214 = sbr.rel target = $region36
            $region35: #{tpu_custom_call.1} parent=31 // pred_region
              // Predicated region
              $region48: #{tpu_custom_call.1} parent=35 // pred_check
                _
              $region49: #{tpu_custom_call.1} parent=35 // pred_check_branch
                %259 = sbr.rel (0) target = $region51
              $region50: #{tpu_custom_call.1} parent=35 // pred_region
                loop: start=0, step=1, limit=1
                $region52: #{tpu_custom_call.1} parent=50 // loop_pre_header
                  _
                $region53: #{tpu_custom_call.1} parent=50 // loop_header
                  %s261 = sphi 0, %s265
                  %p262 = scmp.ge.s32.totalorder %s261, 1
                  %s266 = sphi %s210, %s210
                  %s267 = sphi %s205, %s205
                $region54: #{tpu_custom_call.1} parent=50 // loop_header_branch
                  %264 = sbr.rel (%p262) target = $region58
                $region55: #{tpu_custom_call.1} parent=50 // loop_body
                  _
                $region56: #{tpu_custom_call.1} parent=50 // loop_footer
                  %s265 = sadd.s32 1, %s261
                $region57: #{tpu_custom_call.1} parent=50 // loop_footer_branch
                  %260 = sbr.rel target = $region53
                $region58: #{tpu_custom_call.1} parent=50 // loop_exit
                  _
                loop: start=0, step=1, limit=1
                $region59: #{tpu_custom_call.1} parent=50 // loop_pre_header
                  _
                $region60: #{tpu_custom_call.1} parent=50 // loop_header
                  %s270 = sphi 0, %s274
                  %p271 = scmp.ge.s32.totalorder %s270, 1
                  %s275 = sphi %s210, %s210
                  %s276 = sphi %s205, %s205
                $region61: #{tpu_custom_call.1} parent=50 // loop_header_branch
                  %273 = sbr.rel (%p271) target = $region65
                $region62: #{tpu_custom_call.1} parent=50 // loop_body
                  %v277 = vld [vmem:[%s275] sm:$0xf]
                  %278 = vst [vmem:[%s276] sm:$0xf] %v277
                  %v279 = vld [vmem:[%s275 + $0x8] sm:$0xf]
                  %280 = vst [vmem:[%s276 + $0x4] sm:$0xf] %v279
                  %v281 = vld [vmem:[%s275 + $0x10] sm:$0xf]
                  %282 = vst [vmem:[%s276 + $0x8] sm:$0xf] %v281
                  %v283 = vld [vmem:[%s275 + $0x18] sm:$0xf]
                  %284 = vst [vmem:[%s276 + $0xc] sm:$0xf] %v283
                  %v285 = vld [vmem:[%s275 + $0x20] sm:$0xf]
                  %286 = vst [vmem:[%s276 + $0x10] sm:$0xf] %v285
                  %v287 = vld [vmem:[%s275 + $0x28] sm:$0xf]
                  %288 = vst [vmem:[%s276 + $0x14] sm:$0xf] %v287
                  %v289 = vld [vmem:[%s275 + $0x30] sm:$0xf]
                  %290 = vst [vmem:[%s276 + $0x18] sm:$0xf] %v289
                  %v291 = vld [vmem:[%s275 + $0x38] sm:$0xf]
                  %292 = vst [vmem:[%s276 + $0x1c] sm:$0xf] %v291
                  %v293 = vld [vmem:[%s275 + $0x40] sm:$0xf]
                  %294 = vst [vmem:[%s276 + $0x20] sm:$0xf] %v293
                  %v295 = vld [vmem:[%s275 + $0x48] sm:$0xf]
                  %296 = vst [vmem:[%s276 + $0x24] sm:$0xf] %v295
                  %v297 = vld [vmem:[%s275 + $0x50] sm:$0xf]
                  %298 = vst [vmem:[%s276 + $0x28] sm:$0xf] %v297
                  %v299 = vld [vmem:[%s275 + $0x58] sm:$0xf]
                  %300 = vst [vmem:[%s276 + $0x2c] sm:$0xf] %v299
                  %v301 = vld [vmem:[%s275 + $0x60] sm:$0xf]
                  %302 = vst [vmem:[%s276 + $0x30] sm:$0xf] %v301
                  %v303 = vld [vmem:[%s275 + $0x68] sm:$0xf]
                  %304 = vst [vmem:[%s276 + $0x34] sm:$0xf] %v303
                  %v305 = vld [vmem:[%s275 + $0x70] sm:$0xf]
                  %306 = vst [vmem:[%s276 + $0x38] sm:$0xf] %v305
                  %v307 = vld [vmem:[%s275 + $0x78] sm:$0xf]
                  %308 = vst [vmem:[%s276 + $0x3c] sm:$0xf] %v307
                $region63: #{tpu_custom_call.1} parent=50 // loop_footer
                  %s274 = sadd.s32 1, %s270
                $region64: #{tpu_custom_call.1} parent=50 // loop_footer_branch
                  %269 = sbr.rel target = $region60
                $region65: #{tpu_custom_call.1} parent=50 // loop_exit
                  _
              $region51: #{tpu_custom_call.1} parent=35 // pred_fallthru
                _
            $region36: #{tpu_custom_call.1} parent=31 // pred_fallthru
              _
            // Predicated region
            $region37: #{tpu_custom_call.1} parent=31 // pred_check
              _
            $region38: #{tpu_custom_call.1} parent=31 // pred_check_branch
              %216 = sbr.rel (0) target = $region40
            $region39: #{tpu_custom_call.1} parent=31 // pred_region
              loop: start=0, step=1, limit=1
              $region41: #{tpu_custom_call.1} parent=39 // loop_pre_header
                _
              $region42: #{tpu_custom_call.1} parent=39 // loop_header
                %s219 = sphi 0, %s223
                %p220 = scmp.ge.s32.totalorder %s219, 1
                %s224 = sphi %s210, %s210
                %s225 = sphi %s205, %s205
              $region43: #{tpu_custom_call.1} parent=39 // loop_header_branch
                %222 = sbr.rel (%p220) target = $region47
              $region44: #{tpu_custom_call.1} parent=39 // loop_body
                %v226 = vld [vmem:[%s224] sm:$0xf]
                %227 = vst [vmem:[%s225] sm:$0xf] %v226
                %v228 = vld [vmem:[%s224 + $0x8] sm:$0xf]
                %229 = vst [vmem:[%s225 + $0x4] sm:$0xf] %v228
                %v230 = vld [vmem:[%s224 + $0x10] sm:$0xf]
                %231 = vst [vmem:[%s225 + $0x8] sm:$0xf] %v230
                %v232 = vld [vmem:[%s224 + $0x18] sm:$0xf]
                %233 = vst [vmem:[%s225 + $0xc] sm:$0xf] %v232
                %v234 = vld [vmem:[%s224 + $0x20] sm:$0xf]
                %235 = vst [vmem:[%s225 + $0x10] sm:$0xf] %v234
                %v236 = vld [vmem:[%s224 + $0x28] sm:$0xf]
                %237 = vst [vmem:[%s225 + $0x14] sm:$0xf] %v236
                %v238 = vld [vmem:[%s224 + $0x30] sm:$0xf]
                %239 = vst [vmem:[%s225 + $0x18] sm:$0xf] %v238
                %v240 = vld [vmem:[%s224 + $0x38] sm:$0xf]
                %241 = vst [vmem:[%s225 + $0x1c] sm:$0xf] %v240
                %v242 = vld [vmem:[%s224 + $0x40] sm:$0xf]
                %243 = vst [vmem:[%s225 + $0x20] sm:$0xf] %v242
                %v244 = vld [vmem:[%s224 + $0x48] sm:$0xf]
                %245 = vst [vmem:[%s225 + $0x24] sm:$0xf] %v244
                %v246 = vld [vmem:[%s224 + $0x50] sm:$0xf]
                %247 = vst [vmem:[%s225 + $0x28] sm:$0xf] %v246
                %v248 = vld [vmem:[%s224 + $0x58] sm:$0xf]
                %249 = vst [vmem:[%s225 + $0x2c] sm:$0xf] %v248
                %v250 = vld [vmem:[%s224 + $0x60] sm:$0xf]
                %251 = vst [vmem:[%s225 + $0x30] sm:$0xf] %v250
                %v252 = vld [vmem:[%s224 + $0x68] sm:$0xf]
                %253 = vst [vmem:[%s225 + $0x34] sm:$0xf] %v252
                %v254 = vld [vmem:[%s224 + $0x70] sm:$0xf]
                %255 = vst [vmem:[%s225 + $0x38] sm:$0xf] %v254
                %v256 = vld [vmem:[%s224 + $0x78] sm:$0xf]
                %257 = vst [vmem:[%s225 + $0x3c] sm:$0xf] %v256
              $region45: #{tpu_custom_call.1} parent=39 // loop_footer
                %s223 = sadd.s32 1, %s219
              $region46: #{tpu_custom_call.1} parent=39 // loop_footer_branch
                %218 = sbr.rel target = $region42
              $region47: #{tpu_custom_call.1} parent=39 // loop_exit
                _
            $region40: #{tpu_custom_call.1} parent=31 // pred_fallthru
              _
          $region32: #{tpu_custom_call.1} parent=27 // pred_fallthru
            _
          %309 = vnop
        $region28: #{tpu_custom_call.1} parent=23 // pred_fallthru
          _
        // Predicated region
        $region66: #{tpu_custom_call.1} parent=23 // pred_check
          %p310 = pneg %p74
        $region67: #{tpu_custom_call.1} parent=23 // pred_check_branch
          %312 = sbr.rel (%p310) target = $region69
        $region68: #{tpu_custom_call.1} parent=23 // pred_region
          %s313 = smul.u32 16, %s22
          %p314 = scmp.lt.s32.totalorder %s313, 31
          %s315 = scalar_select %p314, %s313, 31
          %s316 = smul.addr %s315, 4
          %s317 = scalar_lea.vmem %s1, %s316
          %s318 = smul.u32 16, %s22
        $region69: #{tpu_custom_call.1} parent=23 // pred_fallthru
          _
        // Predicated region
        $region70: #{tpu_custom_call.1} parent=23 // pred_check
          %p319 = pneg %p100
        $region71: #{tpu_custom_call.1} parent=23 // pred_check_branch
          %321 = sbr.rel (%p319) target = $region73
        $region72: #{tpu_custom_call.1} parent=23 // pred_region
          %s322 = smul.u32 16, %s21
          %p323 = scmp.lt.s32.totalorder %s322, 31
          %s324 = scalar_select %p323, %s322, 31
          %s325 = smul.addr %s324, 8
          %s326 = scalar_lea.vmem %s2, %s325
          %s327 = smul.u32 16, %s21
        $region73: #{tpu_custom_call.1} parent=23 // pred_fallthru
          _
      $region24: #{tpu_custom_call.1} parent=5 // pred_fallthru
        _
      %p328 = scmp.le.s32.totalorder 1, %s14
      %p329 = scmp.lt.s32.totalorder %s14, 5
      %p330 = pnand %p328, %p329
      %p331 = pneg %p330
      // Predicated region
      $region74: #{tpu_custom_call.1} parent=5 // pred_check
        _
      $region75: #{tpu_custom_call.1} parent=5 // pred_check_branch
        %333 = sbr.rel (%p330) target = $region77
      $region76: #{tpu_custom_call.1} parent=5 // pred_region
        %s334 = ssub.s32 %s14, 1
        %s335 = sand.u32 %s41, 1
        %s336 = sand.u32 %s41, 1
        %s337 = smul.addr %s336, 64
        %s338 = scalar_lea.vmem [#allocation3], %s337
        // Predicated region
        $region78: #{tpu_custom_call.1} parent=76 // pred_check
          %p339 = pneg %p54
        $region79: #{tpu_custom_call.1} parent=76 // pred_check_branch
          %341 = sbr.rel (%p339) target = $region81
        $region80: #{tpu_custom_call.1} parent=76 // pred_region
          _
        $region81: #{tpu_custom_call.1} parent=76 // pred_fallthru
          _
        %s342 = sand.u32 %s41, 1
        %s343 = sand.u32 %s41, 1
        %s344 = smul.addr %s343, 64
        %s345 = scalar_lea.vmem [#allocation3], %s344
        %p346 = pneg %p54
        %p347 = pneg %p51
        %s348 = smul.u32 16, %s24
        %p349 = scmp.lt.s32.totalorder %s348, 31
        %s350 = scalar_select %p349, %s348, 31
        %s351 = smul.addr %s350, 4
        %s352 = scalar_lea.vmem %s1, %s351
        %p353 = pneg %p80
        %p354 = pneg %p77
        %s355 = smul.u32 16, %s23
        %p356 = scmp.lt.s32.totalorder %s355, 31
        %s357 = scalar_select %p356, %s355, 31
        %s358 = smul.addr %s357, 8
        %s359 = scalar_lea.vmem %s2, %s358
        %p360 = pneg %p106
        %p361 = pneg %p103
        %p362 = pneg %p127
        %p363 = pneg %p124
        %p364 = pneg %p148
        %p365 = pneg %p145
        %p366 = pneg %p174
        %p367 = pneg %p171
        %s368 = sand.u32 %s161, 1
        %s369 = scalar_lea.sflag [#allocation5], %s368
        %s370 = sand.u32 %s161, 1
        %s371 = smul.addr %s370, 128
        %s372 = scalar_lea.vmem [#allocation4], %s371
        %s373 = smul.u32 16, %s23
        %s374 = smul.u32 16, %s24
        %p375 = scmp.lt.s32.totalorder %s374, 31
        %s376 = scalar_select %p375, %s374, 31
        %s377 = smul.addr %s376, 4
        %s378 = scalar_lea.vmem %s1, %s377
        %s379 = smul.u32 16, %s24
        %s380 = smul.u32 16, %s23
        %p381 = scmp.lt.s32.totalorder %s380, 31
        %s382 = scalar_select %p381, %s380, 31
        %s383 = smul.addr %s382, 8
        %s384 = scalar_lea.vmem %s2, %s383
        %s385 = smul.u32 16, %s23
        %s386 = smul.u32 16, %s23
        %p388 = scmp.eq.s32.totalorder %s24, 0
        // Predicated region
        $region82: #{tpu_custom_call.1} parent=76 // pred_check
          %p389 = pneg %p388
        $region83: #{tpu_custom_call.1} parent=76 // pred_check_branch
          %391 = sbr.rel (%p389) target = $region85
        $region84: #{tpu_custom_call.1} parent=76 // pred_region
          %vm392 = vcmask 64512
          %393 = vst.msk [vmem:[#allocation2] sm:$0xff] %vm392, 0.0
          %394 = vst.msk [vmem:[#allocation2 + $0x8] sm:$0xff] %vm392, 0.0
          %395 = vst.msk [vmem:[#allocation2 + $0x10] sm:$0xff] %vm392, 0.0
          %396 = vst.msk [vmem:[#allocation2 + $0x18] sm:$0xff] %vm392, 0.0
          %397 = vst.msk [vmem:[#allocation2 + $0x20] sm:$0xff] %vm392, 0.0
          %398 = vst.msk [vmem:[#allocation2 + $0x28] sm:$0xff] %vm392, 0.0
          %399 = vst.msk [vmem:[#allocation2 + $0x30] sm:$0xff] %vm392, 0.0
          %400 = vst.msk [vmem:[#allocation2 + $0x38] sm:$0xff] %vm392, 0.0
          %401 = vst.msk [vmem:[#allocation2 + $0x40] sm:$0xff] %vm392, 0.0
          %402 = vst.msk [vmem:[#allocation2 + $0x48] sm:$0xff] %vm392, 0.0
          %403 = vst.msk [vmem:[#allocation2 + $0x50] sm:$0xff] %vm392, 0.0
          %404 = vst.msk [vmem:[#allocation2 + $0x58] sm:$0xff] %vm392, 0.0
          %405 = vst.msk [vmem:[#allocation2 + $0x60] sm:$0xff] %vm392, 0.0
          %406 = vst.msk [vmem:[#allocation2 + $0x68] sm:$0xff] %vm392, 0.0
          %407 = vst.msk [vmem:[#allocation2 + $0x70] sm:$0xff] %vm392, 0.0
          %408 = vst.msk [vmem:[#allocation2 + $0x78] sm:$0xff] %vm392, 0.0
        $region85: #{tpu_custom_call.1} parent=76 // pred_fallthru
          _
        %v409 = vld [vmem:[#allocation2] sm:$0xff]
        %v410 = vld [vmem:[#allocation2 + $0x8] sm:$0xff]
        %v411 = vld [vmem:[#allocation2 + $0x10] sm:$0xff]
        %v412 = vld [vmem:[#allocation2 + $0x18] sm:$0xff]
        %v413 = vld [vmem:[#allocation2 + $0x20] sm:$0xff]
        %v414 = vld [vmem:[#allocation2 + $0x28] sm:$0xff]
        %v415 = vld [vmem:[#allocation2 + $0x30] sm:$0xff]
        %v416 = vld [vmem:[#allocation2 + $0x38] sm:$0xff]
        %v417 = vld [vmem:[#allocation2 + $0x40] sm:$0xff]
        %v418 = vld [vmem:[#allocation2 + $0x48] sm:$0xff]
        %v419 = vld [vmem:[#allocation2 + $0x50] sm:$0xff]
        %v420 = vld [vmem:[#allocation2 + $0x58] sm:$0xff]
        %v421 = vld [vmem:[#allocation2 + $0x60] sm:$0xff]
        %v422 = vld [vmem:[#allocation2 + $0x68] sm:$0xff]
        %v423 = vld [vmem:[#allocation2 + $0x70] sm:$0xff]
        %v424 = vld [vmem:[#allocation2 + $0x78] sm:$0xff]
        %v425 = vld [vmem:[%s338] sm:$0xf]
        %v426 = vld [vmem:[%s338 + $0x4] sm:$0xf]
        %v427 = vld [vmem:[%s338 + $0x8] sm:$0xf]
        %v428 = vld [vmem:[%s338 + $0xc] sm:$0xf]
        %v429 = vld [vmem:[%s338 + $0x10] sm:$0xf]
        %v430 = vld [vmem:[%s338 + $0x14] sm:$0xf]
        %v431 = vld [vmem:[%s338 + $0x18] sm:$0xf]
        %v432 = vld [vmem:[%s338 + $0x1c] sm:$0xf]
        %v433 = vld [vmem:[%s338 + $0x20] sm:$0xf]
        %v434 = vld [vmem:[%s338 + $0x24] sm:$0xf]
        %v435 = vld [vmem:[%s338 + $0x28] sm:$0xf]
        %v436 = vld [vmem:[%s338 + $0x2c] sm:$0xf]
        %v437 = vld [vmem:[%s338 + $0x30] sm:$0xf]
        %v438 = vld [vmem:[%s338 + $0x34] sm:$0xf]
        %v439 = vld [vmem:[%s338 + $0x38] sm:$0xf]
        %v440 = vld [vmem:[%s338 + $0x3c] sm:$0xf]
        %v441 = vld [vmem:[%s378] sm:$0xf]
        %v442 = vld [vmem:[%s378 + $0x4] sm:$0xf]
        %v443 = vld [vmem:[%s378 + $0x8] sm:$0xf]
        %v444 = vld [vmem:[%s378 + $0xc] sm:$0xf]
        %v445 = vld [vmem:[%s378 + $0x10] sm:$0xf]
        %v446 = vld [vmem:[%s378 + $0x14] sm:$0xf]
        %v447 = vld [vmem:[%s378 + $0x18] sm:$0xf]
        %v448 = vld [vmem:[%s378 + $0x1c] sm:$0xf]
        %v449 = vld [vmem:[%s378 + $0x20] sm:$0xf]
        %v450 = vld [vmem:[%s378 + $0x24] sm:$0xf]
        %v451 = vld [vmem:[%s378 + $0x28] sm:$0xf]
        %v452 = vld [vmem:[%s378 + $0x2c] sm:$0xf]
        %v453 = vld [vmem:[%s378 + $0x30] sm:$0xf]
        %v454 = vld [vmem:[%s378 + $0x34] sm:$0xf]
        %v455 = vld [vmem:[%s378 + $0x38] sm:$0xf]
        %v456 = vld [vmem:[%s378 + $0x3c] sm:$0xf]
        %v473 = vunpack.c.l.b16 %v425
        %v474 = vunpack.c.l.b16 %v426
        %v475 = vunpack.c.l.b16 %v427
        %v476 = vunpack.c.l.b16 %v428
        %v477 = vunpack.c.l.b16 %v429
        %v478 = vunpack.c.l.b16 %v430
        %v479 = vunpack.c.l.b16 %v431
        %v480 = vunpack.c.l.b16 %v432
        %v481 = vunpack.c.l.b16 %v433
        %v482 = vunpack.c.l.b16 %v434
        %v483 = vunpack.c.l.b16 %v435
        %v484 = vunpack.c.l.b16 %v436
        %v485 = vunpack.c.l.b16 %v437
        %v486 = vunpack.c.l.b16 %v438
        %v487 = vunpack.c.l.b16 %v439
        %v488 = vunpack.c.l.b16 %v440
        %v489 = vpack.c.b16 %v474, %v473
        %v490 = vpack.c.b16 %v476, %v475
        %v491 = vpack.c.b16 %v478, %v477
        %v492 = vpack.c.b16 %v480, %v479
        %v493 = vpack.c.b16 %v482, %v481
        %v494 = vpack.c.b16 %v484, %v483
        %v495 = vpack.c.b16 %v486, %v485
        %v496 = vpack.c.b16 %v488, %v487
        %v521 = vunpack.c.l.b16 %v441
        %v522 = vunpack.c.l.b16 %v442
        %v523 = vunpack.c.l.b16 %v443
        %v524 = vunpack.c.l.b16 %v444
        %v525 = vunpack.c.l.b16 %v445
        %v526 = vunpack.c.l.b16 %v446
        %v527 = vunpack.c.l.b16 %v447
        %v528 = vunpack.c.l.b16 %v448
        %v529 = vunpack.c.l.b16 %v449
        %v530 = vunpack.c.l.b16 %v450
        %v531 = vunpack.c.l.b16 %v451
        %v532 = vunpack.c.l.b16 %v452
        %v533 = vunpack.c.l.b16 %v453
        %v534 = vunpack.c.l.b16 %v454
        %v535 = vunpack.c.l.b16 %v455
        %v536 = vunpack.c.l.b16 %v456
        %v537 = vpack.c.b16 %v522, %v521
        %v538 = vpack.c.b16 %v524, %v523
        %v539 = vpack.c.b16 %v526, %v525
        %v540 = vpack.c.b16 %v528, %v527
        %v541 = vpack.c.b16 %v530, %v529
        %v542 = vpack.c.b16 %v532, %v531
        %v543 = vpack.c.b16 %v534, %v533
        %v544 = vpack.c.b16 %v536, %v535
        %553 = vmatprep.subr.bf16.mxu0 0
        %554 = vmatpush1.bf16.msra.mxu0 %v537
        %555 = vmatprep.subr.bf16.mxu0 0
        %556 = vmatpush1.bf16.msra.mxu0 %v538
        %557 = vmatprep.subr.bf16.mxu0 0
        %558 = vmatpush1.bf16.msra.mxu0 %v539
        %559 = vmatprep.subr.bf16.mxu0 0
        %560 = vmatpush1.bf16.msra.mxu0 %v540
        %561 = vmatprep.subr.bf16.mxu0 0
        %562 = vmatpush1.bf16.msra.mxu0 %v541
        %563 = vmatprep.subr.bf16.mxu0 0
        %564 = vmatpush1.bf16.msra.mxu0 %v542
        %565 = vmatprep.subr.bf16.mxu0 0
        %566 = vmatpush1.bf16.msra.mxu0 %v543
        %567 = vmatprep.subr.bf16.mxu0 0
        %568 = vmatpush1.bf16.msra.mxu0 %v544
        %569 = vmatprep.subr.bf16.mxu0 0
        %570 = vmatpush1.bf16.msra.mxu0 0
        %571 = vmatprep.subr.bf16.mxu0 0
        %572 = vmatpush1.bf16.msra.mxu0 0
        %573 = vmatprep.subr.bf16.mxu0 0
        %574 = vmatpush1.bf16.msra.mxu0 0
        %575 = vmatprep.subr.bf16.mxu0 0
        %576 = vmatpush1.bf16.msra.mxu0 0
        %577 = vmatprep.subr.bf16.mxu0 0
        %578 = vmatpush1.bf16.msra.mxu0 0
        %579 = vmatprep.subr.bf16.mxu0 0
        %580 = vmatpush1.bf16.msra.mxu0 0
        %581 = vmatprep.subr.bf16.mxu0 0
        %582 = vmatpush1.bf16.msra.mxu0 0
        %583 = vmatprep.subr.bf16.mxu0 0
        %584 = vmatpush1.bf16.msra.mxu0 0
        %585 = vmatprep.mubr.bf16.mxu0 0
        %586 = vmatmul.mubr.bf16.gmra.mrb[0].mxu0 %v489
        %v587 = vpop.f32.mrb[0].mxu0
        %v588 = vadd.f32 0.0, %v587
        %v589 = vpop.f32.mrb[0].mxu0
        %v590 = vpop.f32.mrb[0].mxu0
        %v591 = vadd.f32 0.0, %v590
        %v592 = vpop.f32.mrb[0].mxu0
        %593 = vmatprep.mubr.bf16.mxu0 0
        %594 = vmatmul.mubr.bf16.gmra.mrb[0].mxu0 %v490
        %v595 = vpop.f32.mrb[0].mxu0
        %v596 = vadd.f32 0.0, %v595
        %v597 = vpop.f32.mrb[0].mxu0
        %v598 = vpop.f32.mrb[0].mxu0
        %v599 = vadd.f32 0.0, %v598
        %v600 = vpop.f32.mrb[0].mxu0
        %601 = vmatprep.mubr.bf16.mxu0 0
        %602 = vmatmul.mubr.bf16.gmra.mrb[0].mxu0 %v491
        %v603 = vpop.f32.mrb[0].mxu0
        %v604 = vadd.f32 0.0, %v603
        %v605 = vpop.f32.mrb[0].mxu0
        %v606 = vpop.f32.mrb[0].mxu0
        %v607 = vadd.f32 0.0, %v606
        %v608 = vpop.f32.mrb[0].mxu0
        %609 = vmatprep.mubr.bf16.mxu0 0
        %610 = vmatmul.mubr.bf16.gmra.mrb[0].mxu0 %v492
        %v611 = vpop.f32.mrb[0].mxu0
        %v612 = vadd.f32 0.0, %v611
        %v613 = vpop.f32.mrb[0].mxu0
        %v614 = vpop.f32.mrb[0].mxu0
        %v615 = vadd.f32 0.0, %v614
        %v616 = vpop.f32.mrb[0].mxu0
        %617 = vmatprep.mubr.bf16.mxu0 0
        %618 = vmatmul.mubr.bf16.gmra.mrb[0].mxu0 %v493
        %v619 = vpop.f32.mrb[0].mxu0
        %v620 = vadd.f32 0.0, %v619
        %v621 = vpop.f32.mrb[0].mxu0
        %v622 = vpop.f32.mrb[0].mxu0
        %v623 = vadd.f32 0.0, %v622
        %v624 = vpop.f32.mrb[0].mxu0
        %625 = vmatprep.mubr.bf16.mxu0 0
        %626 = vmatmul.mubr.bf16.gmra.mrb[0].mxu0 %v494
        %v627 = vpop.f32.mrb[0].mxu0
        %v628 = vadd.f32 0.0, %v627
        %v629 = vpop.f32.mrb[0].mxu0
        %v630 = vpop.f32.mrb[0].mxu0
        %v631 = vadd.f32 0.0, %v630
        %v632 = vpop.f32.mrb[0].mxu0
        %633 = vmatprep.mubr.bf16.mxu0 0
        %634 = vmatmul.mubr.bf16.gmra.mrb[0].mxu0 %v495
        %v635 = vpop.f32.mrb[0].mxu0
        %v636 = vadd.f32 0.0, %v635
        %v637 = vpop.f32.mrb[0].mxu0
        %v638 = vpop.f32.mrb[0].mxu0
        %v639 = vadd.f32 0.0, %v638
        %v640 = vpop.f32.mrb[0].mxu0
        %641 = vmatprep.mubr.bf16.mxu0 0
        %642 = vmatmul.mubr.bf16.gmra.mrb[0].mxu0 %v496
        %v643 = vpop.f32.mrb[0].mxu0
        %v644 = vadd.f32 0.0, %v643
        %v645 = vpop.f32.mrb[0].mxu0
        %v646 = vpop.f32.mrb[0].mxu0
        %v647 = vadd.f32 0.0, %v646
        %v648 = vpop.f32.mrb[0].mxu0
        %649 = vdwg.mxu0
        %v650 = vadd.f32 %v409, %v588
        %v651 = vadd.f32 %v410, %v591
        %v652 = vadd.f32 %v411, %v596
        %v653 = vadd.f32 %v412, %v599
        %v654 = vadd.f32 %v413, %v604
        %v655 = vadd.f32 %v414, %v607
        %v656 = vadd.f32 %v415, %v612
        %v657 = vadd.f32 %v416, %v615
        %v658 = vadd.f32 %v417, %v620
        %v659 = vadd.f32 %v418, %v623
        %v660 = vadd.f32 %v419, %v628
        %v661 = vadd.f32 %v420, %v631
        %v662 = vadd.f32 %v421, %v636
        %v663 = vadd.f32 %v422, %v639
        %v664 = vadd.f32 %v423, %v644
        %v665 = vadd.f32 %v424, %v647
        %vm666 = vcmask 64512
        %667 = vst.msk [vmem:[#allocation2] sm:$0xff] %vm666, %v650
        %668 = vst.msk [vmem:[#allocation2 + $0x8] sm:$0xff] %vm666, %v651
        %669 = vst.msk [vmem:[#allocation2 + $0x10] sm:$0xff] %vm666, %v652
        %670 = vst.msk [vmem:[#allocation2 + $0x18] sm:$0xff] %vm666, %v653
        %671 = vst.msk [vmem:[#allocation2 + $0x20] sm:$0xff] %vm666, %v654
        %672 = vst.msk [vmem:[#allocation2 + $0x28] sm:$0xff] %vm666, %v655
        %673 = vst.msk [vmem:[#allocation2 + $0x30] sm:$0xff] %vm666, %v656
        %674 = vst.msk [vmem:[#allocation2 + $0x38] sm:$0xff] %vm666, %v657
        %675 = vst.msk [vmem:[#allocation2 + $0x40] sm:$0xff] %vm666, %v658
        %676 = vst.msk [vmem:[#allocation2 + $0x48] sm:$0xff] %vm666, %v659
        %677 = vst.msk [vmem:[#allocation2 + $0x50] sm:$0xff] %vm666, %v660
        %678 = vst.msk [vmem:[#allocation2 + $0x58] sm:$0xff] %vm666, %v661
        %679 = vst.msk [vmem:[#allocation2 + $0x60] sm:$0xff] %vm666, %v662
        %680 = vst.msk [vmem:[#allocation2 + $0x68] sm:$0xff] %vm666, %v663
        %681 = vst.msk [vmem:[#allocation2 + $0x70] sm:$0xff] %vm666, %v664
        %682 = vst.msk [vmem:[#allocation2 + $0x78] sm:$0xff] %vm666, %v665
        %p683 = scmp.eq.s32.totalorder %s24, 1
        // Predicated region
        $region86: #{tpu_custom_call.1} parent=76 // pred_check
          %p684 = pneg %p683
        $region87: #{tpu_custom_call.1} parent=76 // pred_check_branch
          %686 = sbr.rel (%p684) target = $region89
        $region88: #{tpu_custom_call.1} parent=76 // pred_region
          %v687 = vld [vmem:[%s384] sm:$0xff]
          %v688 = vld [vmem:[%s384 + $0x8] sm:$0xff]
          %v689 = vld [vmem:[%s384 + $0x10] sm:$0xff]
          %v690 = vld [vmem:[%s384 + $0x18] sm:$0xff]
          %v691 = vld [vmem:[%s384 + $0x20] sm:$0xff]
          %v692 = vld [vmem:[%s384 + $0x28] sm:$0xff]
          %v693 = vld [vmem:[%s384 + $0x30] sm:$0xff]
          %v694 = vld [vmem:[%s384 + $0x38] sm:$0xff]
          %v695 = vld [vmem:[%s384 + $0x40] sm:$0xff]
          %v696 = vld [vmem:[%s384 + $0x48] sm:$0xff]
          %v697 = vld [vmem:[%s384 + $0x50] sm:$0xff]
          %v698 = vld [vmem:[%s384 + $0x58] sm:$0xff]
          %v699 = vld [vmem:[%s384 + $0x60] sm:$0xff]
          %v700 = vld [vmem:[%s384 + $0x68] sm:$0xff]
          %v701 = vld [vmem:[%s384 + $0x70] sm:$0xff]
          %v702 = vld [vmem:[%s384 + $0x78] sm:$0xff]
          %v703 = vld [vmem:[#allocation2] sm:$0xff]
          %v704 = vld [vmem:[#allocation2 + $0x8] sm:$0xff]
          %v705 = vld [vmem:[#allocation2 + $0x10] sm:$0xff]
          %v706 = vld [vmem:[#allocation2 + $0x18] sm:$0xff]
          %v707 = vld [vmem:[#allocation2 + $0x20] sm:$0xff]
          %v708 = vld [vmem:[#allocation2 + $0x28] sm:$0xff]
          %v709 = vld [vmem:[#allocation2 + $0x30] sm:$0xff]
          %v710 = vld [vmem:[#allocation2 + $0x38] sm:$0xff]
          %v711 = vld [vmem:[#allocation2 + $0x40] sm:$0xff]
          %v712 = vld [vmem:[#allocation2 + $0x48] sm:$0xff]
          %v713 = vld [vmem:[#allocation2 + $0x50] sm:$0xff]
          %v714 = vld [vmem:[#allocation2 + $0x58] sm:$0xff]
          %v715 = vld [vmem:[#allocation2 + $0x60] sm:$0xff]
          %v716 = vld [vmem:[#allocation2 + $0x68] sm:$0xff]
          %v717 = vld [vmem:[#allocation2 + $0x70] sm:$0xff]
          %v718 = vld [vmem:[#allocation2 + $0x78] sm:$0xff]
          %735 = vrot.lane.b32.xlu0 %v703, 8
          %v736 = vpop.permute.xlu0 %735
          %737 = vrot.lane.b32.xlu0 %v704, 8
          %v738 = vpop.permute.xlu0 %737
          %739 = vrot.lane.b32.xlu0 %v705, 8
          %v740 = vpop.permute.xlu0 %739
          %741 = vrot.lane.b32.xlu0 %v706, 8
          %v742 = vpop.permute.xlu0 %741
          %743 = vrot.lane.b32.xlu0 %v707, 8
          %v744 = vpop.permute.xlu0 %743
          %745 = vrot.lane.b32.xlu0 %v708, 8
          %v746 = vpop.permute.xlu0 %745
          %747 = vrot.lane.b32.xlu0 %v709, 8
          %v748 = vpop.permute.xlu0 %747
          %749 = vrot.lane.b32.xlu0 %v710, 8
          %v750 = vpop.permute.xlu0 %749
          %751 = vrot.lane.b32.xlu0 %v711, 8
          %v752 = vpop.permute.xlu0 %751
          %753 = vrot.lane.b32.xlu0 %v712, 8
          %v754 = vpop.permute.xlu0 %753
          %755 = vrot.lane.b32.xlu0 %v713, 8
          %v756 = vpop.permute.xlu0 %755
          %757 = vrot.lane.b32.xlu0 %v714, 8
          %v758 = vpop.permute.xlu0 %757
          %759 = vrot.lane.b32.xlu0 %v715, 8
          %v760 = vpop.permute.xlu0 %759
          %761 = vrot.lane.b32.xlu0 %v716, 8
          %v762 = vpop.permute.xlu0 %761
          %763 = vrot.lane.b32.xlu0 %v717, 8
          %v764 = vpop.permute.xlu0 %763
          %765 = vrot.lane.b32.xlu0 %v718, 8
          %v766 = vpop.permute.xlu0 %765
          %v783 = vsel %vm666, %v687, %v736
          %v784 = vsel %vm666, %v688, %v738
          %v785 = vsel %vm666, %v689, %v740
          %v786 = vsel %vm666, %v690, %v742
          %v787 = vsel %vm666, %v691, %v744
          %v788 = vsel %vm666, %v692, %v746
          %v789 = vsel %vm666, %v693, %v748
          %v790 = vsel %vm666, %v694, %v750
          %v791 = vsel %vm666, %v695, %v752
          %v792 = vsel %vm666, %v696, %v754
          %v793 = vsel %vm666, %v697, %v756
          %v794 = vsel %vm666, %v698, %v758
          %v795 = vsel %vm666, %v699, %v760
          %v796 = vsel %vm666, %v700, %v762
          %v797 = vsel %vm666, %v701, %v764
          %v798 = vsel %vm666, %v702, %v766
          %v799 = vld [vmem:[%s3] sm:$0xff]
          %v800 = vld [vmem:[%s3 + $0x8] sm:$0xff]
          %v801 = vld [vmem:[%s4] sm:$0x1]
          %v803 = vlaneseq
          %v804 = vshrl.u32 %v803, 7
          %v805 = vsub.s32 0, %v804
          %v806 = vrot.slane %v801, %v805
          %vm808 = vcmask 130048
          %v810 = vsel %vm808, %v783, 0
          %v813 = vsel %vm808, %v784, 0
          %v816 = vsel %vm808, %v785, 0
          %v819 = vsel %vm808, %v786, 0
          %v822 = vsel %vm808, %v787, 0
          %v825 = vsel %vm808, %v788, 0
          %v828 = vsel %vm808, %v789, 0
          %v831 = vsel %vm808, %v790, 0
          %v834 = vsel %vm808, %v791, 0
          %v837 = vsel %vm808, %v792, 0
          %v840 = vsel %vm808, %v793, 0
          %v843 = vsel %vm808, %v794, 0
          %v846 = vsel %vm808, %v795, 0
          %v849 = vsel %vm808, %v796, 0
          %v852 = vsel %vm808, %v797, 0
          %v855 = vsel %vm808, %v798, 0
          %857 = vmatprep.subr.mxu0 0.0
          %858 = vmatpush1.msra.mxu0 %v799
          %859 = vmatprep.subr.mxu0 0.0
          %860 = vmatpush1.msra.mxu0 %v800
          %861 = vmatprep.subr.mxu0 0.0
          %862 = vmatpush1.msra.mxu0 0.0
          %863 = vmatprep.subr.mxu0 0.0
          %864 = vmatpush1.msra.mxu0 0.0
          %865 = vmatprep.subr.mxu0 0.0
          %866 = vmatpush1.msra.mxu0 0.0
          %867 = vmatprep.subr.mxu0 0.0
          %868 = vmatpush1.msra.mxu0 0.0
          %869 = vmatprep.subr.mxu0 0.0
          %870 = vmatpush1.msra.mxu0 0.0
          %871 = vmatprep.subr.mxu0 0.0
          %872 = vmatpush1.msra.mxu0 0.0
          %873 = vmatprep.subr.mxu0 0.0
          %874 = vmatpush1.msra.mxu0 0.0
          %875 = vmatprep.subr.mxu0 0.0
          %876 = vmatpush1.msra.mxu0 0.0
          %877 = vmatprep.subr.mxu0 0.0
          %878 = vmatpush1.msra.mxu0 0.0
          %879 = vmatprep.subr.mxu0 0.0
          %880 = vmatpush1.msra.mxu0 0.0
          %881 = vmatprep.subr.mxu0 0.0
          %882 = vmatpush1.msra.mxu0 0.0
          %883 = vmatprep.subr.mxu0 0.0
          %884 = vmatpush1.msra.mxu0 0.0
          %885 = vmatprep.subr.mxu0 0.0
          %886 = vmatpush1.msra.mxu0 0.0
          %887 = vmatprep.subr.mxu0 0.0
          %888 = vmatpush1.msra.mxu0 0.0
          %889 = vmatprep.subr.mxu0 0.0
          %890 = vmatpush1.msra.mxu0 0.0
          %891 = vmatprep.subr.mxu0 0.0
          %892 = vmatpush1.msra.mxu0 0.0
          %893 = vmatprep.subr.mxu0 0.0
          %894 = vmatpush1.msra.mxu0 0.0
          %895 = vmatprep.subr.mxu0 0.0
          %896 = vmatpush1.msra.mxu0 0.0
          %897 = vmatprep.subr.mxu0 0.0
          %898 = vmatpush1.msra.mxu0 0.0
          %899 = vmatprep.subr.mxu0 0.0
          %900 = vmatpush1.msra.mxu0 0.0
          %901 = vmatprep.subr.mxu0 0.0
          %902 = vmatpush1.msra.mxu0 0.0
          %903 = vmatprep.subr.mxu0 0.0
          %904 = vmatpush1.msra.mxu0 0.0
          %905 = vmatprep.subr.mxu0 0.0
          %906 = vmatpush1.msra.mxu0 0.0
          %907 = vmatprep.subr.mxu0 0.0
          %908 = vmatpush1.msra.mxu0 0.0
          %909 = vmatprep.subr.mxu0 0.0
          %910 = vmatpush1.msra.mxu0 0.0
          %911 = vmatprep.subr.mxu0 0.0
          %912 = vmatpush1.msra.mxu0 0.0
          %913 = vmatprep.subr.mxu0 0.0
          %914 = vmatpush1.msra.mxu0 0.0
          %915 = vmatprep.subr.mxu0 0.0
          %916 = vmatpush1.msra.mxu0 0.0
          %917 = vmatprep.subr.mxu0 0.0
          %918 = vmatpush1.msra.mxu0 0.0
          %919 = vmatprep.subr.mxu0 0.0
          %920 = vmatpush1.msra.mxu0 0.0
          %921 = vmatprep.mubr.f32.mxu0 0.0
          %922 = vmatmul.mubr.f32.gmra.mrb[0].mxu0 %v810
          %v923 = vpop.f32.mrb[0].mxu0
          %v924 = vadd.f32 %v806, %v923
          %v925 = vpop.f32.mrb[0].mxu0
          %926 = vmatprep.mubr.f32.mxu0 0.0
          %927 = vmatmul.mubr.f32.gmra.mrb[0].mxu0 %v813
          %v928 = vpop.f32.mrb[0].mxu0
          %v929 = vadd.f32 %v806, %v928
          %v930 = vpop.f32.mrb[0].mxu0
          %931 = vmatprep.mubr.f32.mxu0 0.0
          %932 = vmatmul.mubr.f32.gmra.mrb[0].mxu0 %v816
          %v933 = vpop.f32.mrb[0].mxu0
          %v934 = vadd.f32 %v806, %v933
          %v935 = vpop.f32.mrb[0].mxu0
          %936 = vmatprep.mubr.f32.mxu0 0.0
          %937 = vmatmul.mubr.f32.gmra.mrb[0].mxu0 %v819
          %v938 = vpop.f32.mrb[0].mxu0
          %v939 = vadd.f32 %v806, %v938
          %v940 = vpop.f32.mrb[0].mxu0
          %941 = vmatprep.mubr.f32.mxu0 0.0
          %942 = vmatmul.mubr.f32.gmra.mrb[0].mxu0 %v822
          %v943 = vpop.f32.mrb[0].mxu0
          %v944 = vadd.f32 %v806, %v943
          %v945 = vpop.f32.mrb[0].mxu0
          %946 = vmatprep.mubr.f32.mxu0 0.0
          %947 = vmatmul.mubr.f32.gmra.mrb[0].mxu0 %v825
          %v948 = vpop.f32.mrb[0].mxu0
          %v949 = vadd.f32 %v806, %v948
          %v950 = vpop.f32.mrb[0].mxu0
          %951 = vmatprep.mubr.f32.mxu0 0.0
          %952 = vmatmul.mubr.f32.gmra.mrb[0].mxu0 %v828
          %v953 = vpop.f32.mrb[0].mxu0
          %v954 = vadd.f32 %v806, %v953
          %v955 = vpop.f32.mrb[0].mxu0
          %956 = vmatprep.mubr.f32.mxu0 0.0
          %957 = vmatmul.mubr.f32.gmra.mrb[0].mxu0 %v831
          %v958 = vpop.f32.mrb[0].mxu0
          %v959 = vadd.f32 %v806, %v958
          %v960 = vpop.f32.mrb[0].mxu0
          %961 = vmatprep.mubr.f32.mxu0 0.0
          %962 = vmatmul.mubr.f32.gmra.mrb[0].mxu0 %v834
          %v963 = vpop.f32.mrb[0].mxu0
          %v964 = vadd.f32 %v806, %v963
          %v965 = vpop.f32.mrb[0].mxu0
          %966 = vmatprep.mubr.f32.mxu0 0.0
          %967 = vmatmul.mubr.f32.gmra.mrb[0].mxu0 %v837
          %v968 = vpop.f32.mrb[0].mxu0
          %v969 = vadd.f32 %v806, %v968
          %v970 = vpop.f32.mrb[0].mxu0
          %971 = vmatprep.mubr.f32.mxu0 0.0
          %972 = vmatmul.mubr.f32.gmra.mrb[0].mxu0 %v840
          %v973 = vpop.f32.mrb[0].mxu0
          %v974 = vadd.f32 %v806, %v973
          %v975 = vpop.f32.mrb[0].mxu0
          %976 = vmatprep.mubr.f32.mxu0 0.0
          %977 = vmatmul.mubr.f32.gmra.mrb[0].mxu0 %v843
          %v978 = vpop.f32.mrb[0].mxu0
          %v979 = vadd.f32 %v806, %v978
          %v980 = vpop.f32.mrb[0].mxu0
          %981 = vmatprep.mubr.f32.mxu0 0.0
          %982 = vmatmul.mubr.f32.gmra.mrb[0].mxu0 %v846
          %v983 = vpop.f32.mrb[0].mxu0
          %v984 = vadd.f32 %v806, %v983
          %v985 = vpop.f32.mrb[0].mxu0
          %986 = vmatprep.mubr.f32.mxu0 0.0
          %987 = vmatmul.mubr.f32.gmra.mrb[0].mxu0 %v849
          %v988 = vpop.f32.mrb[0].mxu0
          %v989 = vadd.f32 %v806, %v988
          %v990 = vpop.f32.mrb[0].mxu0
          %991 = vmatprep.mubr.f32.mxu0 0.0
          %992 = vmatmul.mubr.f32.gmra.mrb[0].mxu0 %v852
          %v993 = vpop.f32.mrb[0].mxu0
          %v994 = vadd.f32 %v806, %v993
          %v995 = vpop.f32.mrb[0].mxu0
          %996 = vmatprep.mubr.f32.mxu0 0.0
          %997 = vmatmul.mubr.f32.gmra.mrb[0].mxu0 %v855
          %v998 = vpop.f32.mrb[0].mxu0
          %v999 = vadd.f32 %v806, %v998
          %v1000 = vpop.f32.mrb[0].mxu0
          %1001 = vdwg.mxu0
          %1002 = vst [vmem:[%s372] sm:$0xff] %v924
          %1003 = vst [vmem:[%s372 + $0x8] sm:$0xff] %v929
          %1004 = vst [vmem:[%s372 + $0x10] sm:$0xff] %v934
          %1005 = vst [vmem:[%s372 + $0x18] sm:$0xff] %v939
          %1006 = vst [vmem:[%s372 + $0x20] sm:$0xff] %v944
          %1007 = vst [vmem:[%s372 + $0x28] sm:$0xff] %v949
          %1008 = vst [vmem:[%s372 + $0x30] sm:$0xff] %v954
          %1009 = vst [vmem:[%s372 + $0x38] sm:$0xff] %v959
          %1010 = vst [vmem:[%s372 + $0x40] sm:$0xff] %v964
          %1011 = vst [vmem:[%s372 + $0x48] sm:$0xff] %v969
          %1012 = vst [vmem:[%s372 + $0x50] sm:$0xff] %v974
          %1013 = vst [vmem:[%s372 + $0x58] sm:$0xff] %v979
          %1014 = vst [vmem:[%s372 + $0x60] sm:$0xff] %v984
          %1015 = vst [vmem:[%s372 + $0x68] sm:$0xff] %v989
          %1016 = vst [vmem:[%s372 + $0x70] sm:$0xff] %v994
          %1017 = vst [vmem:[%s372 + $0x78] sm:$0xff] %v999
        $region89: #{tpu_custom_call.1} parent=76 // pred_fallthru
          _
        %s1018 = sand.u32 %s161, 1
        %s1019 = scalar_lea.sflag [#allocation5], %s1018
        %s1020 = sand.u32 %s161, 1
        %s1021 = smul.addr %s1020, 128
        %s1022 = scalar_lea.vmem [#allocation4], %s1021
        // Predicated region
        $region90: #{tpu_custom_call.1} parent=76 // pred_check
          %p1023 = pneg %p171
        $region91: #{tpu_custom_call.1} parent=76 // pred_check_branch
          %1025 = sbr.rel (%p1023) target = $region93
        $region92: #{tpu_custom_call.1} parent=76 // pred_region
          %s1026 = smul.u32 16, %s23
          %s1028 = ssub.s32 2048, 2048
          %1029 = vsyncadd %s1019, %s1028
          %s1030 = smul.addr %s1026, 128
          %s1031 = scalar_lea.hbm %s5, %s1030
          %s1032 = sshll.u32 %s1022, 4
          %s1033 = int_to_ptr.vmem [resolvable:$true] %s1032
          %1038 = dma.vmem_to_hbm [thread:$0]  %s1033, 2048, %s1031, %s1019, 128, 128, 8
        $region93: #{tpu_custom_call.1} parent=76 // pred_fallthru
          _
      $region77: #{tpu_custom_call.1} parent=5 // pred_fallthru
        _
      %p1039 = scmp.le.s32.totalorder 2, %s14
      // Predicated region
      $region94: #{tpu_custom_call.1} parent=5 // pred_check
        %p1040 = pneg %p1039
      $region95: #{tpu_custom_call.1} parent=5 // pred_check_branch
        %1042 = sbr.rel (%p1040) target = $region97
      $region96: #{tpu_custom_call.1} parent=5 // pred_region
        %s1043 = ssub.s32 %s14, 2
        // Predicated region
        $region98: #{tpu_custom_call.1} parent=96 // pred_check
          %p1044 = pneg %p177
        $region99: #{tpu_custom_call.1} parent=96 // pred_check_branch
          %1046 = sbr.rel (%p1044) target = $region101
        $region100: #{tpu_custom_call.1} parent=96 // pred_region
          %s1047 = sand.u32 %s162, 1
          %s1048 = scalar_lea.sflag [#allocation5], %s1047
          %s1049 = sand.u32 %s162, 1
          %s1050 = smul.addr %s1049, 128
          %s1051 = scalar_lea.vmem [#allocation4], %s1050
          %1052 = dma.done %s1048, 2048
        $region101: #{tpu_custom_call.1} parent=96 // pred_fallthru
          _
      $region97: #{tpu_custom_call.1} parent=5 // pred_fallthru
        _
    $region6: #{tpu_custom_call.1} parent=1 // loop_footer
      %s18 = sadd.s32 1, %s14
    $region7: #{tpu_custom_call.1} parent=1 // loop_footer_branch
      %13 = sbr.rel target = $region3
    $region8: #{tpu_custom_call.1} parent=1 // loop_exit
      _
    %1053 = vsyncpa [#allocation5], 1
    %s1054 = scalar_lea.sflag [#allocation5], 1
    %1055 = vsyncpa %s1054, 1

</llo_original>
